<compile_context>
chip_gen: v7x
topology: tpu7x:2x2x1
jax: 0.10.0
libtpu: 0.0.40
codegen_flags: <defaults>
</compile_context>

<pallas_src>
import math

import jax
import jax.numpy as jnp
from jax import lax
from jax.experimental import pallas as pl
from jax.experimental.pallas import tpu as pltpu


def _round_up(x, m):
    return ((x + m - 1) // m) * m


def _cdiv(a, b):
    return (a + b - 1) // b


def _vmem_budget_bytes():
    """Half of physical VMEM, capped at 64 MiB (>= 32 MiB floor)."""
    try:
        cap = pltpu.get_tpu_info().vmem_capacity_bytes
    except Exception:
        cap = 128 * 1024 * 1024
    return max(min(cap // 2, 64 * 1024 * 1024), 32 * 1024 * 1024)


def _pick_tm(M, Kd, tn, budget):
    """Largest M tile (multiple of 8, <= 1024) whose double-buffered footprint fits."""
    if M <= 8:
        return M                                     # full-dim block, no OOB rows
    fixed = 2 * Kd * tn * 2 + 2 * tn * 4             # weight (bf16) + bias (f32), 2 bufs
    per_row = 2 * Kd * 4 + 2 * tn * 4                # x (f32) + out (f32) per row, 2 bufs
    avail = int(budget * 0.7) - fixed
    tm = max(8, min(1024, avail // max(per_row, 1)))
    tm = (tm // 8) * 8
    # keep >= 2 M tiles so both v7x TensorCores get work (harmless on 1-TC chips)
    tm = min(tm, _round_up(_cdiv(M, 2), 8))
    return max(8, tm)


# ---------------------------------------------------------------------------
# pointwise / im2col matmul path: (M, Kd) @ (Kd, Nw) + bias
# ---------------------------------------------------------------------------
def _matmul_bias_kernel(x_ref, w_ref, b_ref, o_ref):
    # x_ref: (tm, Kd) input tile (cast to bf16 here -> no wrapper-side copy)
    # w_ref: (Kd, tn) bf16 weight tile ; b_ref: (1, tn) f32 ; o_ref: (tm, tn)
    acc = jnp.dot(x_ref[...].astype(jnp.bfloat16), w_ref[...],
                  preferred_element_type=jnp.float32)
    o_ref[...] = (acc + b_ref[...]).astype(o_ref.dtype)


def _matmul_bias(x2, w_p, b_p, n_out, tn, out_dtype=jnp.float32):
    """(M, Kd) @ (Kd, Nw) + bias -> (M, n_out). Nw >= n_out (zero-padded weight)."""
    M, Kd = x2.shape
    _, Nw = w_p.shape
    budget = _vmem_budget_bytes()
    tm = _pick_tm(M, Kd, tn, budget)
    grid = (_cdiv(M, tm), Nw // tn)

    cost = pl.CostEstimate(
        flops=2 * M * Kd * n_out, transcendentals=0,
        bytes_accessed=(M * Kd * x2.dtype.itemsize + Kd * Nw * 2 + Nw * 4
                        + M * n_out * jnp.dtype(out_dtype).itemsize))

    return pl.pallas_call(
        _matmul_bias_kernel,
        out_shape=jax.ShapeDtypeStruct((M, n_out), out_dtype),
        grid_spec=pl.GridSpec(
            grid=grid,
            in_specs=[
                # x: block index depends only on i -> stays resident across the
                #    inner N sweep; the big operand is read from HBM exactly once.
                pl.BlockSpec((tm, Kd), lambda i, j: (i, 0)),
                # weight / bias: when Nw == tn (small C_out) the block index is
                # constant, so the single weight block is DMA'd once for the whole
                # grid; for tiled C_out it is re-fetched per inner N step.
                pl.BlockSpec((Kd, tn), lambda i, j: (0, j)),
                pl.BlockSpec((1, tn), lambda i, j: (0, j)),
            ],
            out_specs=pl.BlockSpec((tm, tn), lambda i, j: (i, j)),
        ),
        compiler_params=pltpu.CompilerParams(
            dimension_semantics=("parallel", "parallel"),
            vmem_limit_bytes=budget),
        cost_estimate=cost,
    )(x2, w_p, b_p)


# ---------------------------------------------------------------------------
# kernel_size > 1 path: K shifted dots accumulated in-kernel (no im2col in HBM)
# ---------------------------------------------------------------------------
def _make_tap_kernel(K, D, S, T_out):
    def kernel(x_ref, w_ref, b_ref, o_ref):
        # x_ref: (1, T_pad, C_in)  ; w_ref: (K, C_in, tn) bf16
        # b_ref: (1, tn) f32       ; o_ref: (1, T_out, tn)
        acc = None
        if S == 1:
            xb = x_ref[0]                                  # (T_pad, C_in), one load
        for k in range(K):
            if S == 1:
                xk = xb[k * D:k * D + T_out, :]            # static shifted window
            else:
                xk = x_ref[0, pl.ds(k * D, T_out, stride=S), :]
            part = jnp.dot(xk.astype(jnp.bfloat16), w_ref[k],
                           preferred_element_type=jnp.float32)
            acc = part if acc is None else acc + part
        o_ref[0] = (acc + b_ref[...]).astype(o_ref.dtype)
    return kernel


def _conv_taps(x_pad, w_taps, b_p, n_out, tn, T_out, K, D, S,
               out_dtype=jnp.float32):
    B, T_pad, C_in = x_pad.shape
    _, _, Nw = w_taps.shape
    budget = _vmem_budget_bytes()
    grid = (B, Nw // tn)

    cost = pl.CostEstimate(
        flops=2 * B * T_out * K * C_in * n_out, transcendentals=0,
        bytes_accessed=(B * T_pad * C_in * x_pad.dtype.itemsize
                        + K * C_in * Nw * 2 + Nw * 4
                        + B * T_out * n_out * jnp.dtype(out_dtype).itemsize))

    return pl.pallas_call(
        _make_tap_kernel(K, D, S, T_out),
        out_shape=jax.ShapeDtypeStruct((B, T_out, n_out), out_dtype),
        grid_spec=pl.GridSpec(
            grid=grid,
            in_specs=[
                # one un-duplicated copy of x per batch element; its block index is
                # constant across the inner N sweep -> no re-DMA.
                pl.BlockSpec((1, T_pad, C_in), lambda b, j: (b, 0, 0)),
                # all K tap weights for this N tile; constant block index when Nw == tn
                pl.BlockSpec((K, C_in, tn), lambda b, j: (0, 0, j)),
                pl.BlockSpec((1, tn), lambda b, j: (0, j)),
            ],
            out_specs=pl.BlockSpec((1, T_out, tn), lambda b, j: (b, 0, j)),
        ),
        compiler_params=pltpu.CompilerParams(
            dimension_semantics=("parallel", "parallel"),
            vmem_limit_bytes=budget),
        cost_estimate=cost,
    )(x_pad, w_taps, b_p)


class ConvPallas:
    """JAX/Pallas equivalent of the PyTorch `Conv` module (Conv1d in transposes)."""

    def __init__(self, in_channels, out_channels, kernel_size=1, stride=1,
                 padding=0, dilation=1, bias=True, w_init='relu', key=None,
                 out_dtype=jnp.float32):
        self.in_channels = in_channels
        self.out_channels = out_channels
        self.kernel_size = kernel_size
        self.stride = stride
        self.padding = padding
        self.dilation = dilation
        self.use_bias = bias
        self.out_dtype = out_dtype

        if key is None:
            key = jax.random.PRNGKey(0)
        k_w, k_b = jax.random.split(key)

        # Conv1d weight shape: (out_channels, in_channels, kernel_size)
        # xavier_uniform_ with gain = calculate_gain('relu') = sqrt(2)
        gain = math.sqrt(2.0) if w_init == 'relu' else 1.0
        fan_in = in_channels * kernel_size
        fan_out = out_channels * kernel_size
        a = gain * math.sqrt(6.0 / (fan_in + fan_out))
        self.weight = jax.random.uniform(
            k_w, (out_channels, in_channels, kernel_size),
            minval=-a, maxval=a, dtype=jnp.float32)

        if bias:
            # PyTorch default Conv1d bias init: U(-1/sqrt(fan_in), 1/sqrt(fan_in))
            bound = 1.0 / math.sqrt(fan_in)
            self.bias = jax.random.uniform(
                k_b, (out_channels,), minval=-bound, maxval=bound,
                dtype=jnp.float32)
        else:
            self.bias = jnp.zeros((out_channels,), dtype=jnp.float32)

        # ---- one-time weight/bias prep (keep transpose/pad/cast out of __call__) ----
        Kd = kernel_size * in_channels
        w_dbuf = 2 * Kd * out_channels * 2            # double-buffered bf16 weight bytes
        if out_channels >= 512 and (out_channels > 2048 or w_dbuf > 16 * 1024 * 1024):
            self._tn = 256                            # tile C_out (lane-dense, 2x128)
            self._nw = _round_up(out_channels, 256)
        else:
            self._tn = out_channels                   # single full-width block (no pad)
            self._nw = out_channels
        pad_n = self._nw - out_channels
        w_taps = jnp.transpose(self.weight, (2, 1, 0))          # (K, C_in, C_out)
        if pad_n:
            w_taps = jnp.pad(w_taps, ((0, 0), (0, 0), (0, pad_n)))
        self._w_taps = w_taps.astype(jnp.bfloat16)              # (K, C_in, Nw)
        self._w_flat = self._w_taps.reshape(Kd, self._nw)       # [k*C_in + c, o]
        self._bias_row = jnp.pad(self.bias.reshape(1, -1),
                                 ((0, 0), (0, pad_n))).astype(jnp.float32)

    def __call__(self, x):
        # x: (B, T, C_in)
        B, T, C_in = x.shape
        K, S, P, D = self.kernel_size, self.stride, self.padding, self.dilation
        N = self.out_channels

        x_pad = jnp.pad(x, ((0, 0), (P, P), (0, 0))) if P > 0 else x
        T_pad = T + 2 * P
        T_out = (T_pad - D * (K - 1) - 1) // S + 1

        if K == 1:
            # pointwise conv == matmul over flattened (B*T_out) rows (reshape is free
            # for the default S=1, P=0 case -- no data duplication or wrapper cast).
            x_eff = x_pad[:, :(T_out - 1) * S + 1:S, :] if S > 1 else x_pad
            x2 = x_eff.reshape(B * T_out, C_in)
            out2 = _matmul_bias(x2, self._w_flat, self._bias_row, N, self._tn,
                                out_dtype=self.out_dtype)
            return out2.reshape(B, T_out, N)

        # kernel_size > 1: accumulate the K taps inside the kernel from a single copy
        # of x (no K-times duplicated im2col matrix round-tripping through HBM).
        budget = _vmem_budget_bytes()
        cl = _round_up(C_in, 128)                     # lane-padded VMEM footprint
        tnl = _round_up(self._tn, 128)
        fp = 2 * T_pad * cl * 4 + 2 * K * cl * tnl * 2 + 2 * T_out * tnl * 4
        if fp <= int(budget * 0.8):
            return _conv_taps(x_pad, self._w_taps, self._bias_row, N, self._tn,
                              T_out, K, D, S, out_dtype=self.out_dtype)

        # TODO(synk): time-tile the tap path with a (K-1)*D halo (two consecutive
        # time blocks per grid step) instead of falling back to im2col for very long
        # sequences / wide channels that exceed the per-batch VMEM budget.
        cols = [x_pad[:, k * D:k * D + (T_out - 1) * S + 1:S, :] for k in range(K)]
        patches = jnp.concatenate(cols, axis=-1).reshape(B * T_out, K * C_in)
        out2 = _matmul_bias(patches, self._w_flat, self._bias_row, N, self._tn,
                            out_dtype=self.out_dtype)
        return out2.reshape(B, T_out, N)


def _ref_conv(x, weight, bias, stride, padding, dilation):
    """Independent reference via lax.conv_general_dilated (NCL layout)."""
    x_ncl = jnp.transpose(x, (0, 2, 1))
    y = lax.conv_general_dilated(
        x_ncl, weight,
        window_strides=(stride,),
        padding=[(padding, padding)],
        rhs_dilation=(dilation,),
        dimension_numbers=('NCH', 'OIH', 'NCH'))
    y = y + bias[None, :, None]
    return jnp.transpose(y, (0, 2, 1))


if __name__ == "__main__":
    key = jax.random.PRNGKey(0)
    k_x1, k_p1, k_x2, k_p2 = jax.random.split(key, 4)

    # ---- test 1: default pointwise conv (kernel_size=1) ----
    B, T, C_in, C_out = 2, 8, 4, 32
    x1 = jax.random.normal(k_x1, (B, T, C_in), dtype=jnp.float32)
    conv1 = ConvPallas(in_channels=C_in, out_channels=C_out, kernel_size=1,
                       stride=1, padding=0, dilation=1, bias=True,
                       w_init='relu', key=k_p1)
    out1 = conv1(x1)
    jax.block_until_ready(out1)
    ref1 = _ref_conv(x1, conv1.weight, conv1.bias, 1, 0, 1)
    assert out1.shape == (B, T, C_out)
    assert jnp.allclose(out1, ref1, atol=5e-2, rtol=5e-2), "kernel_size=1 mismatch"

    # ---- test 2: kernel_size=3 with padding (exercises the in-kernel tap path) ----
    B2, T2 = 2, 16
    x2 = jax.random.normal(k_x2, (B2, T2, C_in), dtype=jnp.float32)
    conv2 = ConvPallas(in_channels=C_in, out_channels=C_out, kernel_size=3,
                       stride=1, padding=1, dilation=1, bias=True,
                       w_init='relu', key=k_p2)
    out2 = conv2(x2)
    jax.block_until_ready(out2)
    ref2 = _ref_conv(x2, conv2.weight, conv2.bias, 1, 1, 1)
    assert out2.shape == (B2, T2, C_out)
    assert jnp.allclose(out2, ref2, atol=5e-2, rtol=5e-2), "kernel_size=3 mismatch"

    print("KERNEL_OK")
</pallas_src>

<mosaic_0001>
module attributes {stable_mosaic.version = 11 : i64} {
  func.func @_matmul_bias_kernel(%arg0: i32, %arg1: i32, %arg2: memref<8x4xf32, #tpu.memory_space<vmem>>, %arg3: memref<4x32xbf16, #tpu.memory_space<vmem>>, %arg4: memref<1x32xf32, #tpu.memory_space<vmem>>, %arg5: memref<8x32xf32, #tpu.memory_space<vmem>>) attributes {dimension_semantics = [#tpu.dimension_semantics<parallel>, #tpu.dimension_semantics<parallel>], iteration_bounds = array<i64: 2, 1>, scalar_prefetch = 0 : i64, scratch_operands = 0 : i64, tpu.core_type = #tpu.core_type<tc>, window_params = [{transform_indices = @transform_0, window_bounds = array<i64: 8, 4>}, {transform_indices = @transform_1, window_bounds = array<i64: 4, 32>}, {transform_indices = @transform_2, window_bounds = array<i64: 1, 32>}, {transform_indices = @transform_3, window_bounds = array<i64: 8, 32>}]} {
    %c0 = arith.constant 0 : index
    %c0_0 = arith.constant 0 : index
    %0 = vector.load %arg2[%c0, %c0_0] : memref<8x4xf32, #tpu.memory_space<vmem>>, vector<8x4xf32>
    %1 = arith.truncf %0 : vector<8x4xf32> to vector<8x4xbf16>
    %c0_1 = arith.constant 0 : index
    %c0_2 = arith.constant 0 : index
    %2 = vector.load %arg3[%c0_1, %c0_2] : memref<4x32xbf16, #tpu.memory_space<vmem>>, vector<4x32xbf16>
    %cst = arith.constant dense<0.000000e+00> : vector<8x32xf32>
    %3 = tpu.matmul %1, %2, %cst {dimension_numbers = #tpu.dot_dimension_numbers<[1], [0], [0], [1], [0, 0, 1, 1], [], []>} : vector<8x4xbf16>, vector<4x32xbf16>, vector<8x32xf32> -> vector<8x32xf32>
    %c0_3 = arith.constant 0 : index
    %c0_4 = arith.constant 0 : index
    %4 = vector.load %arg4[%c0_3, %c0_4] : memref<1x32xf32, #tpu.memory_space<vmem>>, vector<1x32xf32>
    %5 = vector.broadcast %4 : vector<1x32xf32> to vector<8x32xf32>
    %6 = arith.addf %3, %5 : vector<8x32xf32>
    %c0_5 = arith.constant 0 : index
    %c0_6 = arith.constant 0 : index
    %7 = vector.load %arg5[%c0_5, %c0_6] : memref<8x32xf32, #tpu.memory_space<vmem>>, vector<8x32xf32>
    tpu.vector_store %arg5[%c0_5, %c0_6], %6 {strides = array<i32>} : memref<8x32xf32, #tpu.memory_space<vmem>>, vector<8x32xf32>,
    return
  }
  func.func @transform_0(%arg0: i32, %arg1: i32) -> (i32, i32) {
    %c0_i32 = arith.constant 0 : i32
    %c0_i32_0 = arith.constant 0 : i32
    return %arg0, %c0_i32 : i32, i32
  }
  func.func @transform_1(%arg0: i32, %arg1: i32) -> (i32, i32) {
    %c0_i32 = arith.constant 0 : i32
    %c0_i32_0 = arith.constant 0 : i32
    return %c0_i32, %arg1 : i32, i32
  }
  func.func @transform_2(%arg0: i32, %arg1: i32) -> (i32, i32) {
    %c0_i32 = arith.constant 0 : i32
    %c0_i32_0 = arith.constant 0 : i32
    return %c0_i32, %arg1 : i32, i32
  }
  func.func @transform_3(%arg0: i32, %arg1: i32) -> (i32, i32) {
    %c0_i32 = arith.constant 0 : i32
    return %arg0, %arg1 : i32, i32
  }
}

</mosaic_0001>

<llo_original>
// kernel: tpu_custom_call.1
$region0: #{tpu_custom_call.1}
  #allocation0 [shape = 'u32[]', space=smem, size = 0x4, offset = 0x4, fixed_abs, tag = 'smem constant byte address 0x4 - core index']
  #allocation1 [shape = 'u32[144,128]{1,0:T(1,128)}', space=vmem, size = 0x12000, scoped, tag = 'internal scratch']
  %s0 = inlined_call_operand.hbm [shape: f32[16,4], index: 0, kind: input, shape index: {}]
  %s1 = inlined_call_operand.hbm [shape: bf16[4,32], index: 1, kind: input, shape index: {}]
  %s2 = inlined_call_operand.hbm [shape: f32[1,32], index: 2, kind: input, shape index: {}]
  %s3 = inlined_call_operand.hbm [shape: f32[16,32], index: 3, kind: output, shape index: {}]
  %s4 = sld [smem:[#allocation0]]
  $region57: #{tpu_custom_call.1} parent=0
    _
  %s6 = ssub.s32 1, %s4
  %s7 = scalar_select 0, %s6, %s4
  $region1: #{tpu_custom_call.1} parent=0
    #allocation2 [shape = 'u8[8192]{0}', space=vmem, size = 0x2000, scoped, tag = 'input window, operand 0']
    #allocation3 [shape = 's32[2]{0}', space=sflag, size = 0x8, scoped, tag = 'scoped memory for tpu_custom_call.1']
    #allocation4 [shape = 's32[2]{0}', space=sflag, size = 0x8, scoped, tag = 'scoped memory for tpu_custom_call.1']
    #allocation5 [shape = 'u8[1024]{0}', space=vmem, size = 0x400, scoped, tag = 'input window, operand 1, single buffered']
    #allocation6 [shape = 's32[1]{0}', space=sflag, size = 0x4, scoped, tag = 'scoped memory for tpu_custom_call.1']
    #allocation7 [shape = 'u8[512]{0}', space=vmem, size = 0x400, scoped, tag = 'input window, operand 2, single buffered']
    #allocation8 [shape = 'u8[8192]{0}', space=vmem, size = 0x2000, scoped, tag = 'output window, operand 0']
    %8 = vsyncpa [#allocation3], 0
    %s9 = scalar_lea.sflag [#allocation3], 1
    %10 = vsyncpa %s9, 0
    %11 = vsyncpa [#allocation6], 0
    %12 = vsyncpa [#allocation4], 0
    %s13 = scalar_lea.sflag [#allocation4], 1
    %14 = vsyncpa %s13, 0
    loop: start=0, step=1, limit=4
    $region2: #{tpu_custom_call.1} parent=1 // loop_pre_header
      _
    $region3: #{tpu_custom_call.1} parent=1 // loop_header
      %s16 = sphi 0, %s20
      %p17 = scmp.ge.s32.totalorder %s16, 4
      %s23 = sphi 0, %s35
      %s24 = sphi 0, %s31
      %s25 = sphi 0, %s23
      %s26 = sphi 0, %s24
      %s27 = sphi 0, %s25
      %s28 = sphi 0, %s26
      %s38 = sphi 0, %s40
      %s41 = sphi 0, %s38
      %s42 = sphi 0, %s41
      %s58 = sphi 0, %s42
      %s64 = sphi 0, %s66
      %s67 = sphi 0, %s64
      %s68 = sphi 0, %s67
      %s84 = sphi 0, %s68
      %s90 = sphi 0, %s92
      %s93 = sphi 0, %s90
      %s94 = sphi 0, %s93
      %s110 = sphi 0, %s94
      %s118 = sphi 0, %s120
      %s121 = sphi 0, %s118
      %s122 = sphi 0, %s121
      %s138 = sphi 0, %s122
    $region4: #{tpu_custom_call.1} parent=1 // loop_header_branch
      %19 = sbr.rel (%p17) target = $region8
    $region5: #{tpu_custom_call.1} parent=1 // loop_body
      %s21 = ssub.s32 %s16, 1
      %s22 = ssub.s32 %s16, 2
      %s29 = sadd.s32 1, %s24
      %p30 = scmp.ge.s32.totalorder %s29, 1
      %s31 = scalar_select %p30, 0, %s29
      %s32 = sadd.s32 1, %s23
      %s33 = scalar_select %p30, %s32, %s23
      %p34 = scmp.ge.s32.totalorder %s33, 2
      %s35 = scalar_select %p34, 0, %s33
      %s36 = ssub.s32 %s23, %s35
      %p37 = scmp.eq.s32.totalorder %s36, 0
      %s39 = sadd.s32 %s38, 1
      %s40 = scalar_select %p37, %s38, %s39
      %p43 = pneg %p37
      %p44 = scmp.eq.s32.totalorder %s16, 1
      %p45 = por %p43, %p44
      %p46 = scmp.ne.s32.totalorder %s38, %s41
      %p47 = scmp.eq.s32.totalorder %s16, 0
      %p48 = por %p46, %p47
      %p49 = scmp.ne.s32.totalorder %s38, %s41
      %p50 = scmp.eq.s32.totalorder %s21, 1
      %p51 = por %p49, %p50
      %p52 = scmp.ne.s32.totalorder %s41, %s42
      %p53 = scmp.eq.s32.totalorder %s21, 0
      %p54 = por %p52, %p53
      %p55 = scmp.ne.s32.totalorder %s41, %s42
      %p56 = scmp.eq.s32.totalorder %s22, 1
      %p57 = por %p55, %p56
      %p59 = scmp.ne.s32.totalorder %s42, %s58
      %p60 = scmp.eq.s32.totalorder %s22, 0
      %p61 = por %p59, %p60
      %s62 = ssub.s32 %s24, %s31
      %p63 = scmp.eq.s32.totalorder %s62, 0
      %s65 = sadd.s32 %s64, 1
      %s66 = scalar_select %p63, %s64, %s65
      %p69 = pneg %p63
      %p70 = scmp.eq.s32.totalorder %s16, 1
      %p71 = por %p69, %p70
      %p72 = scmp.ne.s32.totalorder %s64, %s67
      %p73 = scmp.eq.s32.totalorder %s16, 0
      %p74 = por %p72, %p73
      %p75 = scmp.ne.s32.totalorder %s64, %s67
      %p76 = scmp.eq.s32.totalorder %s21, 1
      %p77 = por %p75, %p76
      %p78 = scmp.ne.s32.totalorder %s67, %s68
      %p79 = scmp.eq.s32.totalorder %s21, 0
      %p80 = por %p78, %p79
      %p81 = scmp.ne.s32.totalorder %s67, %s68
      %p82 = scmp.eq.s32.totalorder %s22, 1
      %p83 = por %p81, %p82
      %p85 = scmp.ne.s32.totalorder %s68, %s84
      %p86 = scmp.eq.s32.totalorder %s22, 0
      %p87 = por %p85, %p86
      %s88 = ssub.s32 %s24, %s31
      %p89 = scmp.eq.s32.totalorder %s88, 0
      %s91 = sadd.s32 %s90, 1
      %s92 = scalar_select %p89, %s90, %s91
      %p95 = pneg %p89
      %p96 = scmp.eq.s32.totalorder %s16, 1
      %p97 = por %p95, %p96
      %p98 = scmp.ne.s32.totalorder %s90, %s93
      %p99 = scmp.eq.s32.totalorder %s16, 0
      %p100 = por %p98, %p99
      %p101 = scmp.ne.s32.totalorder %s90, %s93
      %p102 = scmp.eq.s32.totalorder %s21, 1
      %p103 = por %p101, %p102
      %p104 = scmp.ne.s32.totalorder %s93, %s94
      %p105 = scmp.eq.s32.totalorder %s21, 0
      %p106 = por %p104, %p105
      %p107 = scmp.ne.s32.totalorder %s93, %s94
      %p108 = scmp.eq.s32.totalorder %s22, 1
      %p109 = por %p107, %p108
      %p111 = scmp.ne.s32.totalorder %s94, %s110
      %p112 = scmp.eq.s32.totalorder %s22, 0
      %p113 = por %p111, %p112
      %s114 = ssub.s32 %s23, %s35
      %s115 = ssub.s32 %s24, %s31
      %s116 = sor.u32 %s114, %s115
      %p117 = scmp.eq.s32.totalorder %s116, 0
      %s119 = sadd.s32 %s118, 1
      %s120 = scalar_select %p117, %s118, %s119
      %p123 = pneg %p117
      %p124 = scmp.eq.s32.totalorder %s16, 1
      %p125 = por %p123, %p124
      %p126 = scmp.ne.s32.totalorder %s118, %s121
      %p127 = scmp.eq.s32.totalorder %s16, 0
      %p128 = por %p126, %p127
      %p129 = scmp.ne.s32.totalorder %s118, %s121
      %p130 = scmp.eq.s32.totalorder %s21, 1
      %p131 = por %p129, %p130
      %p132 = scmp.ne.s32.totalorder %s121, %s122
      %p133 = scmp.eq.s32.totalorder %s21, 0
      %p134 = por %p132, %p133
      %p135 = scmp.ne.s32.totalorder %s121, %s122
      %p136 = scmp.eq.s32.totalorder %s22, 1
      %p137 = por %p135, %p136
      %p139 = scmp.ne.s32.totalorder %s122, %s138
      %p140 = scmp.eq.s32.totalorder %s22, 0
      %p141 = por %p139, %p140
      %p142 = scmp.le.s32.totalorder 1, %s16
      %p143 = scmp.lt.s32.totalorder %s16, 3
      %p144 = pnand %p142, %p143
      %p145 = pneg %p144
      // Predicated region
      $region9: #{tpu_custom_call.1} parent=5 // pred_check
        _
      $region10: #{tpu_custom_call.1} parent=5 // pred_check_branch
        %147 = sbr.rel (%p144) target = $region12
      $region11: #{tpu_custom_call.1} parent=5 // pred_region
        %s148 = ssub.s32 %s16, 1
        // Predicated region
        $region13: #{tpu_custom_call.1} parent=11 // pred_check
          %p149 = pneg %p80
        $region14: #{tpu_custom_call.1} parent=11 // pred_check_branch
          %151 = sbr.rel (%p149) target = $region16
        $region15: #{tpu_custom_call.1} parent=11 // pred_region
          %s153 = ssub.s32 32, 32
          %154 = vsyncadd [#allocation6], %s153
          %s155 = smul.addr %s26, 32
          %s156 = scalar_lea.hbm %s1, %s155
          %s158 = sshll.u32 [#allocation5], 4
          %s159 = int_to_ptr.vmem [resolvable:$true] %s158
          %161 = dma.hbm_to_vmem [thread:$0]  %s156, 32, %s159, [#allocation6]
        $region16: #{tpu_custom_call.1} parent=11 // pred_fallthru
          _
        // Predicated region
        $region17: #{tpu_custom_call.1} parent=11 // pred_check
          %p162 = pneg %p106
        $region18: #{tpu_custom_call.1} parent=11 // pred_check_branch
          %164 = sbr.rel (%p162) target = $region20
        $region19: #{tpu_custom_call.1} parent=11 // pred_region
          %s166 = ssub.s32 16, 16
          %167 = vsyncadd [#allocation6], %s166
          %s168 = smul.addr %s26, 16
          %s169 = scalar_lea.hbm %s2, %s168
          %s171 = sshll.u32 [#allocation7], 4
          %s172 = int_to_ptr.vmem [resolvable:$true] %s171
          %174 = dma.hbm_to_vmem [thread:$0]  %s169, 16, %s172, [#allocation6]
        $region20: #{tpu_custom_call.1} parent=11 // pred_fallthru
          _
      $region12: #{tpu_custom_call.1} parent=5 // pred_fallthru
        _
      %p175 = scmp.lt.s32.totalorder %s16, 2
      // Predicated region
      $region21: #{tpu_custom_call.1} parent=5 // pred_check
        %p176 = pneg %p175
      $region22: #{tpu_custom_call.1} parent=5 // pred_check_branch
        %178 = sbr.rel (%p176) target = $region24
      $region23: #{tpu_custom_call.1} parent=5 // pred_region
        // Predicated region
        $region25: #{tpu_custom_call.1} parent=23 // pred_check
          %p179 = pneg %p48
        $region26: #{tpu_custom_call.1} parent=23 // pred_check_branch
          %181 = sbr.rel (%p179) target = $region28
        $region27: #{tpu_custom_call.1} parent=23 // pred_region
          %s182 = sand.u32 %s38, 1
          %s183 = scalar_lea.sflag [#allocation3], %s182
          %s184 = sand.u32 %s38, 1
          %s185 = smul.addr %s184, 8
          %s186 = scalar_lea.vmem [#allocation2], %s185
          %s188 = ssub.s32 128, 128
          %189 = vsyncadd %s183, %s188
          %s190 = smul.addr %s23, 128
          %s191 = scalar_lea.hbm %s0, %s190
          %s193 = sshll.u32 %s186, 4
          %s194 = int_to_ptr.vmem [resolvable:$true] %s193
          %196 = dma.hbm_to_vmem [thread:$0]  %s191, 128, %s194, %s183
        $region28: #{tpu_custom_call.1} parent=23 // pred_fallthru
          _
      $region24: #{tpu_custom_call.1} parent=5 // pred_fallthru
        _
      %p197 = scmp.le.s32.totalorder 1, %s16
      %p198 = scmp.lt.s32.totalorder %s16, 3
      %p199 = pnand %p197, %p198
      %p200 = pneg %p199
      // Predicated region
      $region29: #{tpu_custom_call.1} parent=5 // pred_check
        _
      $region30: #{tpu_custom_call.1} parent=5 // pred_check_branch
        %202 = sbr.rel (%p199) target = $region32
      $region31: #{tpu_custom_call.1} parent=5 // pred_region
        %s203 = ssub.s32 %s16, 1
        %s204 = sand.u32 %s41, 1
        %s205 = scalar_lea.sflag [#allocation3], %s204
        %s206 = sand.u32 %s41, 1
        %s207 = smul.addr %s206, 8
        %s208 = scalar_lea.vmem [#allocation2], %s207
        // Predicated region
        $region33: #{tpu_custom_call.1} parent=31 // pred_check
          %p209 = pneg %p54
        $region34: #{tpu_custom_call.1} parent=31 // pred_check_branch
          %211 = sbr.rel (%p209) target = $region36
        $region35: #{tpu_custom_call.1} parent=31 // pred_region
          %212 = dma.done %s205, 128
        $region36: #{tpu_custom_call.1} parent=31 // pred_fallthru
          _
        // Predicated region
        $region37: #{tpu_custom_call.1} parent=31 // pred_check
          %p213 = pneg %p80
        $region38: #{tpu_custom_call.1} parent=31 // pred_check_branch
          %215 = sbr.rel (%p213) target = $region40
        $region39: #{tpu_custom_call.1} parent=31 // pred_region
          %216 = dma.done [#allocation6], 32
        $region40: #{tpu_custom_call.1} parent=31 // pred_fallthru
          _
        // Predicated region
        $region41: #{tpu_custom_call.1} parent=31 // pred_check
          %p217 = pneg %p106
        $region42: #{tpu_custom_call.1} parent=31 // pred_check_branch
          %219 = sbr.rel (%p217) target = $region44
        $region43: #{tpu_custom_call.1} parent=31 // pred_region
          %220 = dma.done [#allocation6], 16
        $region44: #{tpu_custom_call.1} parent=31 // pred_fallthru
          _
        %s221 = sand.u32 %s41, 1
        %s222 = scalar_lea.sflag [#allocation3], %s221
        %s223 = sand.u32 %s41, 1
        %s224 = smul.addr %s223, 8
        %s225 = scalar_lea.vmem [#allocation2], %s224
        %p226 = pneg %p54
        %p227 = pneg %p51
        %p228 = pneg %p80
        %p229 = pneg %p77
        %p230 = pneg %p106
        %p231 = pneg %p103
        %p232 = pneg %p134
        %p233 = pneg %p131
        %s234 = sand.u32 %s121, 1
        %s235 = scalar_lea.sflag [#allocation4], %s234
        %s236 = sand.u32 %s121, 1
        %s237 = smul.addr %s236, 8
        %s238 = scalar_lea.vmem [#allocation8], %s237
        %v240 = vld [vmem:[%s208] sm:$0xff]
        %v241 = vpack.c.bf16 %v240, %v240
        %v242 = vld [vmem:[#allocation5] sm:$0x3]
        %v243 = vld [vmem:[#allocation7] sm:$0x1]
        %v245 = vlaneseq
        %v246 = vshrl.u32 %v245, 7
        %v247 = vsub.s32 0, %v246
        %v248 = vrot.slane %v243, %v247
        %vm250 = vcmask 31744
        %v252 = vsel %vm250, %v241, 0
        %vm254 = vcmask 1041408
        %v256 = vsel %vm254, %v242, 0
        %258 = vmatprep.subr.bf16.mxu0 0
        %259 = vmatpush1.bf16.msra.mxu0 %v256
        %260 = vmatprep.subr.bf16.mxu0 0
        %261 = vmatpush1.bf16.msra.mxu0 0
        %262 = vmatprep.subr.bf16.mxu0 0
        %263 = vmatpush1.bf16.msra.mxu0 0
        %264 = vmatprep.subr.bf16.mxu0 0
        %265 = vmatpush1.bf16.msra.mxu0 0
        %266 = vmatprep.subr.bf16.mxu0 0
        %267 = vmatpush1.bf16.msra.mxu0 0
        %268 = vmatprep.subr.bf16.mxu0 0
        %269 = vmatpush1.bf16.msra.mxu0 0
        %270 = vmatprep.subr.bf16.mxu0 0
        %271 = vmatpush1.bf16.msra.mxu0 0
        %272 = vmatprep.subr.bf16.mxu0 0
        %273 = vmatpush1.bf16.msra.mxu0 0
        %274 = vmatprep.subr.bf16.mxu0 0
        %275 = vmatpush1.bf16.msra.mxu0 0
        %276 = vmatprep.subr.bf16.mxu0 0
        %277 = vmatpush1.bf16.msra.mxu0 0
        %278 = vmatprep.subr.bf16.mxu0 0
        %279 = vmatpush1.bf16.msra.mxu0 0
        %280 = vmatprep.subr.bf16.mxu0 0
        %281 = vmatpush1.bf16.msra.mxu0 0
        %282 = vmatprep.subr.bf16.mxu0 0
        %283 = vmatpush1.bf16.msra.mxu0 0
        %284 = vmatprep.subr.bf16.mxu0 0
        %285 = vmatpush1.bf16.msra.mxu0 0
        %286 = vmatprep.subr.bf16.mxu0 0
        %287 = vmatpush1.bf16.msra.mxu0 0
        %288 = vmatprep.subr.bf16.mxu0 0
        %289 = vmatpush1.bf16.msra.mxu0 0
        %290 = vmatprep.mubr.bf16.mxu0 0
        %291 = vmatmul.mubr.bf16.gmra.mrb[0].mxu0 %v252
        %v292 = vpop.f32.mrb[0].mxu0
        %v293 = vadd.f32 %v248, %v292
        %v294 = vpop.f32.mrb[0].mxu0
        %v295 = vpop.f32.mrb[0].mxu0
        %v296 = vpop.f32.mrb[0].mxu0
        %297 = vdwg.mxu0
        %vm298 = vcmask 261120
        %299 = vst.msk [vmem:[%s238] sm:$0xff] %vm298, %v293
        %s300 = sand.u32 %s121, 1
        %s301 = scalar_lea.sflag [#allocation4], %s300
        %s302 = sand.u32 %s121, 1
        %s303 = smul.addr %s302, 8
        %s304 = scalar_lea.vmem [#allocation8], %s303
        // Predicated region
        $region45: #{tpu_custom_call.1} parent=31 // pred_check
          %p305 = pneg %p131
        $region46: #{tpu_custom_call.1} parent=31 // pred_check_branch
          %307 = sbr.rel (%p305) target = $region48
        $region47: #{tpu_custom_call.1} parent=31 // pred_region
          %s309 = ssub.s32 128, 128
          %310 = vsyncadd %s301, %s309
          %s311 = sadd.s32 %s26, %s25
          %s312 = smul.addr %s311, 128
          %s313 = scalar_lea.hbm %s3, %s312
          %s315 = sshll.u32 %s304, 4
          %s316 = int_to_ptr.vmem [resolvable:$true] %s315
          %318 = dma.vmem_to_hbm [thread:$0]  %s316, 128, %s313, %s301
        $region48: #{tpu_custom_call.1} parent=31 // pred_fallthru
          _
      $region32: #{tpu_custom_call.1} parent=5 // pred_fallthru
        _
      %p319 = scmp.le.s32.totalorder 2, %s16
      // Predicated region
      $region49: #{tpu_custom_call.1} parent=5 // pred_check
        %p320 = pneg %p319
      $region50: #{tpu_custom_call.1} parent=5 // pred_check_branch
        %322 = sbr.rel (%p320) target = $region52
      $region51: #{tpu_custom_call.1} parent=5 // pred_region
        %s323 = ssub.s32 %s16, 2
        // Predicated region
        $region53: #{tpu_custom_call.1} parent=51 // pred_check
          %p324 = pneg %p137
        $region54: #{tpu_custom_call.1} parent=51 // pred_check_branch
          %326 = sbr.rel (%p324) target = $region56
        $region55: #{tpu_custom_call.1} parent=51 // pred_region
          %s327 = sand.u32 %s122, 1
          %s328 = scalar_lea.sflag [#allocation4], %s327
          %s329 = sand.u32 %s122, 1
          %s330 = smul.addr %s329, 8
          %s331 = scalar_lea.vmem [#allocation8], %s330
          %332 = dma.done %s328, 128
        $region56: #{tpu_custom_call.1} parent=51 // pred_fallthru
          _
      $region52: #{tpu_custom_call.1} parent=5 // pred_fallthru
        _
    $region6: #{tpu_custom_call.1} parent=1 // loop_footer
      %s20 = sadd.s32 1, %s16
    $region7: #{tpu_custom_call.1} parent=1 // loop_footer_branch
      %15 = sbr.rel target = $region3
    $region8: #{tpu_custom_call.1} parent=1 // loop_exit
      _
    %333 = vsyncpa [#allocation3], 1
    %s334 = scalar_lea.sflag [#allocation3], 1
    %335 = vsyncpa %s334, 1
    %336 = vsyncpa [#allocation6], 1
    %337 = vsyncpa [#allocation4], 1
    %s338 = scalar_lea.sflag [#allocation4], 1
    %339 = vsyncpa %s338, 1

</llo_original>
